<compile_context>
chip_gen: v7x
topology: tpu7x:2x2x1
jax: 0.10.0
libtpu: 0.0.40
codegen_flags: <defaults>
</compile_context>

<pallas_src>
import math
import functools

import jax
import jax.numpy as jnp
from jax import lax
from jax.experimental import pallas as pl
from jax.experimental.pallas import tpu as pltpu


# ----------------------------------------------------------------------------
# Pallas kernel: one batch element per grid step; all heads computed in-kernel.
# ----------------------------------------------------------------------------
def _global_pointer_kernel(x_ref, w_ref, b_ref, sin_ref, cos_ref, tri_ref,
                           mrow_ref, mcol_ref, out_ref, *, heads, head_size):
    hs = head_size
    hh = hs // 2

    x = x_ref[0]                      # (L, D)   bf16
    w = w_ref[...]                    # (D, 2*heads*hs) bf16, resident
    bias = b_ref[...]                 # (1, 2*heads*hs) f32, resident
    sin = sin_ref[...]                # (L, hs)  f32, sign-folded half-split
    cos = cos_ref[...]                # (L, hs)  f32, half-split
    tri = tri_ref[...]                # (L, L)   f32 additive triu bias (0 / NEG)

    # One fused projection for every head's q and k (MXU, bf16 in / f32 acc).
    proj = jnp.dot(x, w, preferred_element_type=jnp.float32) + bias  # (L, 2*H*hs)

    HH = heads * hs
    q_all = proj[:, :HH]              # (L, heads*hs)  (1/sqrt(hs) already folded in)
    k_all = proj[:, HH:]              # (L, heads*hs)

    # Pad mask (fused row & col select), hoisted out of the head loop.
    valid2d = (mrow_ref[0] > 0.5) & (mcol_ref[0] > 0.5)   # (L,1)&(1,L) -> (L,L)
    neg = jnp.float32(-1e12 / math.sqrt(hs))              # scaled sentinel

    for h in range(heads):
        sl = slice(h * hs, (h + 1) * hs)
        qh = q_all[:, sl]             # (L, hs) f32
        kh = k_all[:, sl]

        # Half-split RoPE: one XLU roll per tensor, no iota / select.
        qh = qh * cos + pltpu.roll(qh, shift=hh, axis=1) * sin
        kh = kh * cos + pltpu.roll(kh, shift=hh, axis=1) * sin

        # logits[l, m] = sum_f q[l, f] * k[m, f]   (MXU, bf16 in / f32 acc)
        logits = lax.dot_general(qh.astype(jnp.bfloat16), kh.astype(jnp.bfloat16),
                                 (((1,), (1,)), ((), ())),
                                 preferred_element_type=jnp.float32)   # (L, L)

        # Fused pad mask + additive strict-lower-triangle bias (exact reference
        # semantics: scale folded into q, masked cells match bit-for-bit math).
        logits = jnp.where(valid2d, logits, neg) + tri

        out_ref[0, h] = logits


# ----------------------------------------------------------------------------
# Wrapper: parameter layout glue + pallas_call.
# ----------------------------------------------------------------------------
def global_pointer(inputs, mask, W, b, heads, head_size):
    """inputs: (B, L, D) f32; mask: (B, L) int; W: (D, heads*2*hs); b: (heads*2*hs,)."""
    B, L, D = inputs.shape
    hs = head_size
    hh = hs // 2
    scale = 1.0 / math.sqrt(hs)

    # Feature permutation: even indices first, then odd (half-split RoPE layout).
    # Applying the same permutation to q and k columns leaves q·kᵀ unchanged.
    perm = jnp.concatenate([jnp.arange(0, hs, 2), jnp.arange(1, hs, 2)])

    # Split combined projection into q / k parts, permute features, fold the
    # 1/sqrt(hs) scale into the q weights & bias, and fuse into one (D, 2*H*hs)
    # weight:  columns = [q head0 .. q headH-1 | k head0 .. k headH-1].
    W_r = W.reshape(D, heads, 2 * hs)
    Wq = jnp.take(W_r[:, :, :hs], perm, axis=-1) * scale       # (D, heads, hs)
    Wk = jnp.take(W_r[:, :, hs:], perm, axis=-1)               # (D, heads, hs)
    W_fused = jnp.concatenate(
        [Wq.reshape(D, heads * hs), Wk.reshape(D, heads * hs)],
        axis=1).astype(jnp.bfloat16)                           # (D, 2*heads*hs)

    b_r = b.reshape(heads, 2 * hs)
    bq = (jnp.take(b_r[:, :hs], perm, axis=-1) * scale).reshape(heads * hs)
    bk = jnp.take(b_r[:, hs:], perm, axis=-1).reshape(heads * hs)
    b_fused = jnp.concatenate([bq, bk]).reshape(1, 2 * heads * hs).astype(jnp.float32)

    # Half-split RoPE tables (sign folded into sin):
    #   cos2       = [cos_j | cos_j],   sin_signed = [-sin_j | +sin_j]
    theta = jnp.power(10000.0, -2.0 * jnp.arange(hh, dtype=jnp.float32) / hs)
    ang = jnp.arange(L, dtype=jnp.float32)[:, None] * theta[None, :]   # (L, hh)
    sin_h, cos_h = jnp.sin(ang), jnp.cos(ang)
    sin_signed = jnp.concatenate([-sin_h, sin_h], axis=1)              # (L, hs)
    cos2 = jnp.concatenate([cos_h, cos_h], axis=1)                     # (L, hs)

    # Additive strict-lower-triangle bias, precomputed once (resident in VMEM).
    neg = jnp.float32(-1e12 * scale)
    idx = jnp.arange(L)
    tri_bias = jnp.where(idx[None, :] >= idx[:, None],
                         jnp.float32(0.0), neg)                        # (L, L)

    mask_f = mask.astype(jnp.float32)
    mask_row = mask_f[:, :, None]                                      # (B, L, 1)
    mask_col = mask_f[:, None, :]                                      # (B, 1, L)

    x_bf16 = inputs.astype(jnp.bfloat16)

    kernel = functools.partial(_global_pointer_kernel, heads=heads, head_size=hs)

    grid_spec = pltpu.PrefetchScalarGridSpec(
        num_scalar_prefetch=0,
        grid=(B,),
        in_specs=[
            pl.BlockSpec((1, L, D), lambda bi: (bi, 0, 0)),               # x (bf16)
            pl.BlockSpec((D, 2 * heads * hs), lambda bi: (0, 0)),         # W (resident)
            pl.BlockSpec((1, 2 * heads * hs), lambda bi: (0, 0)),         # bias (resident)
            pl.BlockSpec((L, hs), lambda bi: (0, 0)),                     # sin (resident)
            pl.BlockSpec((L, hs), lambda bi: (0, 0)),                     # cos (resident)
            pl.BlockSpec((L, L), lambda bi: (0, 0)),                      # triu bias (resident)
            pl.BlockSpec((1, L, 1), lambda bi: (bi, 0, 0)),               # mask rows
            pl.BlockSpec((1, 1, L), lambda bi: (bi, 0, 0)),               # mask cols
        ],
        out_specs=pl.BlockSpec((1, heads, L, L), lambda bi: (bi, 0, 0, 0)),
    )

    return pl.pallas_call(
        kernel,
        out_shape=jax.ShapeDtypeStruct((B, heads, L, L), jnp.float32),
        grid_spec=grid_spec,
        compiler_params=pltpu.CompilerParams(
            dimension_semantics=("parallel",)),
    )(x_bf16, W_fused, b_fused, sin_signed, cos2, tri_bias, mask_row, mask_col)


# ----------------------------------------------------------------------------
# Pure-JAX reference (mirrors the PyTorch forward, full f32) for verification.
# ----------------------------------------------------------------------------
def global_pointer_reference(inputs, mask, W, b, heads, head_size):
    B, L, D = inputs.shape
    hs = head_size
    proj = inputs @ W + b                               # (B, L, heads*2*hs)
    proj = proj.reshape(B, L, heads, 2 * hs)
    qw, kw = proj[..., :hs], proj[..., hs:]

    theta = jnp.power(10000.0, -2.0 * jnp.arange(hs // 2, dtype=jnp.float32) / hs)
    ang = jnp.arange(L, dtype=jnp.float32)[:, None] * theta[None, :]
    sin = jnp.repeat(jnp.sin(ang), 2, axis=-1)[None, :, None, :]
    cos = jnp.repeat(jnp.cos(ang), 2, axis=-1)[None, :, None, :]

    def rope(v):
        v2 = jnp.stack([-v[..., 1::2], v[..., ::2]], axis=-1).reshape(v.shape)
        return v * cos + v2 * sin

    qw, kw = rope(qw), rope(kw)
    logits = jnp.einsum('blhf,bmhf->bhlm', qw, kw)
    pad = (mask == 0)
    logits = jnp.where(pad[:, None, :, None] | pad[:, None, None, :], -1e12, logits)
    tri = jnp.triu(jnp.ones((L, L), dtype=jnp.float32))
    logits = logits - (1.0 - tri) * 1e12
    return logits / math.sqrt(hs)


if __name__ == "__main__":
    B, L, D = 2, 8, 32
    heads, head_size = 4, 64

    key = jax.random.PRNGKey(0)
    kx, kw, kb = jax.random.split(key, 3)

    inputs = jax.random.normal(kx, (B, L, D), dtype=jnp.float32)
    # Deterministic synthetic Linear parameters (out = x @ W + b here).
    W = 0.02 * jax.random.normal(kw, (D, heads * head_size * 2), dtype=jnp.float32)
    b = 0.02 * jax.random.normal(kb, (heads * head_size * 2,), dtype=jnp.float32)
    # Padding mask: first sequence has 6 valid tokens, second has 4.
    mask = jnp.array([[1, 1, 1, 1, 1, 1, 0, 0],
                      [1, 1, 1, 1, 0, 0, 0, 0]], dtype=jnp.int32)

    out = global_pointer(inputs, mask, W, b, heads, head_size)
    out = jax.block_until_ready(out)

    ref = global_pointer_reference(inputs, mask, W, b, heads, head_size)
    assert out.shape == (B, heads, L, L), out.shape
    # Kernel uses bf16 MXU inputs with f32 accumulation -> slightly looser
    # tolerance than a pure-f32 comparison.  Masked cells match exactly.
    assert jnp.allclose(out, ref, rtol=2e-2, atol=2e-2), "mismatch vs reference"

    print("KERNEL_OK")
</pallas_src>

<mosaic_0001>
module attributes {stable_mosaic.version = 11 : i64} {
  func.func @_global_pointer_kernel(%arg0: i32, %arg1: memref<1x8x32xbf16, #tpu.memory_space<vmem>>, %arg2: memref<32x512xbf16, #tpu.memory_space<vmem>>, %arg3: memref<1x512xf32, #tpu.memory_space<vmem>>, %arg4: memref<8x64xf32, #tpu.memory_space<vmem>>, %arg5: memref<8x64xf32, #tpu.memory_space<vmem>>, %arg6: memref<8x8xf32, #tpu.memory_space<vmem>>, %arg7: memref<1x8x1xf32, #tpu.memory_space<vmem>>, %arg8: memref<1x1x8xf32, #tpu.memory_space<vmem>>, %arg9: memref<1x4x8x8xf32, #tpu.memory_space<vmem>>) attributes {dimension_semantics = [#tpu.dimension_semantics<parallel>], iteration_bounds = array<i64: 2>, scalar_prefetch = 0 : i64, scratch_operands = 0 : i64, tpu.core_type = #tpu.core_type<tc>, window_params = [{transform_indices = @transform_0, window_bounds = array<i64: 1, 8, 32>}, {pipeline_mode = #tpu.pipeline_mode<synchronous>, transform_indices = @transform_1, window_bounds = array<i64: 32, 512>}, {pipeline_mode = #tpu.pipeline_mode<synchronous>, transform_indices = @transform_2, window_bounds = array<i64: 1, 512>}, {pipeline_mode = #tpu.pipeline_mode<synchronous>, transform_indices = @transform_3, window_bounds = array<i64: 8, 64>}, {pipeline_mode = #tpu.pipeline_mode<synchronous>, transform_indices = @transform_4, window_bounds = array<i64: 8, 64>}, {pipeline_mode = #tpu.pipeline_mode<synchronous>, transform_indices = @transform_5, window_bounds = array<i64: 8, 8>}, {transform_indices = @transform_6, window_bounds = array<i64: 1, 8, 1>}, {transform_indices = @transform_7, window_bounds = array<i64: 1, 1, 8>}, {transform_indices = @transform_8, window_bounds = array<i64: 1, 4, 8, 8>}]} {
    %c0 = arith.constant 0 : index
    %c0_0 = arith.constant 0 : index
    %c0_1 = arith.constant 0 : index
    %0 = vector.load %arg1[%c0, %c0_0, %c0_1] : memref<1x8x32xbf16, #tpu.memory_space<vmem>>, vector<1x8x32xbf16>
    %1 = vector.shape_cast %0 : vector<1x8x32xbf16> to vector<8x32xbf16>
    %c0_2 = arith.constant 0 : index
    %c0_3 = arith.constant 0 : index
    %2 = vector.load %arg2[%c0_2, %c0_3] : memref<32x512xbf16, #tpu.memory_space<vmem>>, vector<32x512xbf16>
    %c0_4 = arith.constant 0 : index
    %c0_5 = arith.constant 0 : index
    %3 = vector.load %arg3[%c0_4, %c0_5] : memref<1x512xf32, #tpu.memory_space<vmem>>, vector<1x512xf32>
    %c0_6 = arith.constant 0 : index
    %c0_7 = arith.constant 0 : index
    %4 = vector.load %arg4[%c0_6, %c0_7] : memref<8x64xf32, #tpu.memory_space<vmem>>, vector<8x64xf32>
    %c0_8 = arith.constant 0 : index
    %c0_9 = arith.constant 0 : index
    %5 = vector.load %arg5[%c0_8, %c0_9] : memref<8x64xf32, #tpu.memory_space<vmem>>, vector<8x64xf32>
    %c0_10 = arith.constant 0 : index
    %c0_11 = arith.constant 0 : index
    %6 = vector.load %arg6[%c0_10, %c0_11] : memref<8x8xf32, #tpu.memory_space<vmem>>, vector<8x8xf32>
    %cst = arith.constant dense<0.000000e+00> : vector<8x512xf32>
    %7 = tpu.matmul %1, %2, %cst {dimension_numbers = #tpu.dot_dimension_numbers<[1], [0], [0], [1], [0, 0, 1, 1], [], []>} : vector<8x32xbf16>, vector<32x512xbf16>, vector<8x512xf32> -> vector<8x512xf32>
    %8 = vector.broadcast %3 : vector<1x512xf32> to vector<8x512xf32>
    %9 = arith.addf %7, %8 : vector<8x512xf32>
    %10 = vector.extract_strided_slice %9 {offsets = [0, 0], sizes = [8, 256], strides = [1, 1]} : vector<8x512xf32> to vector<8x256xf32>
    %11 = vector.extract_strided_slice %9 {offsets = [0, 256], sizes = [8, 256], strides = [1, 1]} : vector<8x512xf32> to vector<8x256xf32>
    %c0_12 = arith.constant 0 : index
    %c0_13 = arith.constant 0 : index
    %c0_14 = arith.constant 0 : index
    %12 = vector.load %arg7[%c0_12, %c0_13, %c0_14] : memref<1x8x1xf32, #tpu.memory_space<vmem>>, vector<1x8x1xf32>
    %13 = vector.shape_cast %12 : vector<1x8x1xf32> to vector<8x1xf32>
    %cst_15 = arith.constant 5.000000e-01 : f32
    %14 = vector.broadcast %cst_15 : f32 to vector<8x1xf32>
    %15 = arith.cmpf ogt, %13, %14 : vector<8x1xf32>
    %c0_16 = arith.constant 0 : index
    %c0_17 = arith.constant 0 : index
    %c0_18 = arith.constant 0 : index
    %16 = vector.load %arg8[%c0_16, %c0_17, %c0_18] : memref<1x1x8xf32, #tpu.memory_space<vmem>>, vector<1x1x8xf32>
    %17 = vector.shape_cast %16 : vector<1x1x8xf32> to vector<1x8xf32>
    %cst_19 = arith.constant 5.000000e-01 : f32
    %18 = vector.broadcast %cst_19 : f32 to vector<1x8xf32>
    %19 = arith.cmpf ogt, %17, %18 : vector<1x8xf32>
    %20 = vector.broadcast %15 : vector<8x1xi1> to vector<8x8xi1>
    %21 = vector.broadcast %19 : vector<1x8xi1> to vector<8x8xi1>
    %22 = arith.andi %20, %21 : vector<8x8xi1>
    %23 = vector.extract_strided_slice %10 {offsets = [0, 0], sizes = [8, 64], strides = [1, 1]} : vector<8x256xf32> to vector<8x64xf32>
    %24 = vector.extract_strided_slice %11 {offsets = [0, 0], sizes = [8, 64], strides = [1, 1]} : vector<8x256xf32> to vector<8x64xf32>
    %25 = arith.mulf %23, %5 : vector<8x64xf32>
    %c32_i32 = arith.constant 32 : i32
    %26 = tpu.dynamic_rotate %23 by %c32_i32 dim 1 : vector<8x64xf32>, i32 -> vector<8x64xf32>
    %27 = arith.mulf %26, %4 : vector<8x64xf32>
    %28 = arith.addf %25, %27 : vector<8x64xf32>
    %29 = arith.mulf %24, %5 : vector<8x64xf32>
    %c32_i32_20 = arith.constant 32 : i32
    %30 = tpu.dynamic_rotate %24 by %c32_i32_20 dim 1 : vector<8x64xf32>, i32 -> vector<8x64xf32>
    %31 = arith.mulf %30, %4 : vector<8x64xf32>
    %32 = arith.addf %29, %31 : vector<8x64xf32>
    %33 = arith.truncf %28 : vector<8x64xf32> to vector<8x64xbf16>
    %34 = arith.truncf %32 : vector<8x64xf32> to vector<8x64xbf16>
    %cst_21 = arith.constant dense<0.000000e+00> : vector<8x8xf32>
    %35 = tpu.matmul %33, %34, %cst_21 {dimension_numbers = #tpu.dot_dimension_numbers<[1], [1], [0], [0], [0, 0, 1, 0], [], []>} : vector<8x64xbf16>, vector<8x64xbf16>, vector<8x8xf32> -> vector<8x8xf32>
    %cst_22 = arith.constant -1.250000e+11 : f32
    %36 = vector.broadcast %cst_22 : f32 to vector<8x8xf32>
    %37 = arith.select %22, %35, %36 : vector<8x8xi1>, vector<8x8xf32>
    %38 = arith.addf %37, %6 : vector<8x8xf32>
    %c0_23 = arith.constant 0 : index
    %c0_24 = arith.constant 0 : index
    %c0_25 = arith.constant 0 : index
    %c0_26 = arith.constant 0 : index
    %39 = vector.load %arg9[%c0_23, %c0_24, %c0_25, %c0_26] : memref<1x4x8x8xf32, #tpu.memory_space<vmem>>, vector<1x1x8x8xf32>
    %40 = vector.shape_cast %39 : vector<1x1x8x8xf32> to vector<8x8xf32>
    %41 = vector.shape_cast %38 : vector<8x8xf32> to vector<1x1x8x8xf32>
    tpu.vector_store %arg9[%c0_23, %c0_24, %c0_25, %c0_26], %41 {strides = array<i32>} : memref<1x4x8x8xf32, #tpu.memory_space<vmem>>, vector<1x1x8x8xf32>,
    %42 = vector.extract_strided_slice %10 {offsets = [0, 64], sizes = [8, 64], strides = [1, 1]} : vector<8x256xf32> to vector<8x64xf32>
    %43 = vector.extract_strided_slice %11 {offsets = [0, 64], sizes = [8, 64], strides = [1, 1]} : vector<8x256xf32> to vector<8x64xf32>
    %44 = arith.mulf %42, %5 : vector<8x64xf32>
    %c32_i32_27 = arith.constant 32 : i32
    %45 = tpu.dynamic_rotate %42 by %c32_i32_27 dim 1 : vector<8x64xf32>, i32 -> vector<8x64xf32>
    %46 = arith.mulf %45, %4 : vector<8x64xf32>
    %47 = arith.addf %44, %46 : vector<8x64xf32>
    %48 = arith.mulf %43, %5 : vector<8x64xf32>
    %c32_i32_28 = arith.constant 32 : i32
    %49 = tpu.dynamic_rotate %43 by %c32_i32_28 dim 1 : vector<8x64xf32>, i32 -> vector<8x64xf32>
    %50 = arith.mulf %49, %4 : vector<8x64xf32>
    %51 = arith.addf %48, %50 : vector<8x64xf32>
    %52 = arith.truncf %47 : vector<8x64xf32> to vector<8x64xbf16>
    %53 = arith.truncf %51 : vector<8x64xf32> to vector<8x64xbf16>
    %cst_29 = arith.constant dense<0.000000e+00> : vector<8x8xf32>
    %54 = tpu.matmul %52, %53, %cst_29 {dimension_numbers = #tpu.dot_dimension_numbers<[1], [1], [0], [0], [0, 0, 1, 0], [], []>} : vector<8x64xbf16>, vector<8x64xbf16>, vector<8x8xf32> -> vector<8x8xf32>
    %cst_30 = arith.constant -1.250000e+11 : f32
    %55 = vector.broadcast %cst_30 : f32 to vector<8x8xf32>
    %56 = arith.select %22, %54, %55 : vector<8x8xi1>, vector<8x8xf32>
    %57 = arith.addf %56, %6 : vector<8x8xf32>
    %c0_31 = arith.constant 0 : index
    %c1 = arith.constant 1 : index
    %c0_32 = arith.constant 0 : index
    %c0_33 = arith.constant 0 : index
    %58 = vector.load %arg9[%c0_31, %c1, %c0_32, %c0_33] : memref<1x4x8x8xf32, #tpu.memory_space<vmem>>, vector<1x1x8x8xf32>
    %59 = vector.shape_cast %58 : vector<1x1x8x8xf32> to vector<8x8xf32>
    %60 = vector.shape_cast %57 : vector<8x8xf32> to vector<1x1x8x8xf32>
    tpu.vector_store %arg9[%c0_31, %c1, %c0_32, %c0_33], %60 {strides = array<i32>} : memref<1x4x8x8xf32, #tpu.memory_space<vmem>>, vector<1x1x8x8xf32>,
    %61 = vector.extract_strided_slice %10 {offsets = [0, 128], sizes = [8, 64], strides = [1, 1]} : vector<8x256xf32> to vector<8x64xf32>
    %62 = vector.extract_strided_slice %11 {offsets = [0, 128], sizes = [8, 64], strides = [1, 1]} : vector<8x256xf32> to vector<8x64xf32>
    %63 = arith.mulf %61, %5 : vector<8x64xf32>
    %c32_i32_34 = arith.constant 32 : i32
    %64 = tpu.dynamic_rotate %61 by %c32_i32_34 dim 1 : vector<8x64xf32>, i32 -> vector<8x64xf32>
    %65 = arith.mulf %64, %4 : vector<8x64xf32>
    %66 = arith.addf %63, %65 : vector<8x64xf32>
    %67 = arith.mulf %62, %5 : vector<8x64xf32>
    %c32_i32_35 = arith.constant 32 : i32
    %68 = tpu.dynamic_rotate %62 by %c32_i32_35 dim 1 : vector<8x64xf32>, i32 -> vector<8x64xf32>
    %69 = arith.mulf %68, %4 : vector<8x64xf32>
    %70 = arith.addf %67, %69 : vector<8x64xf32>
    %71 = arith.truncf %66 : vector<8x64xf32> to vector<8x64xbf16>
    %72 = arith.truncf %70 : vector<8x64xf32> to vector<8x64xbf16>
    %cst_36 = arith.constant dense<0.000000e+00> : vector<8x8xf32>
    %73 = tpu.matmul %71, %72, %cst_36 {dimension_numbers = #tpu.dot_dimension_numbers<[1], [1], [0], [0], [0, 0, 1, 0], [], []>} : vector<8x64xbf16>, vector<8x64xbf16>, vector<8x8xf32> -> vector<8x8xf32>
    %cst_37 = arith.constant -1.250000e+11 : f32
    %74 = vector.broadcast %cst_37 : f32 to vector<8x8xf32>
    %75 = arith.select %22, %73, %74 : vector<8x8xi1>, vector<8x8xf32>
    %76 = arith.addf %75, %6 : vector<8x8xf32>
    %c0_38 = arith.constant 0 : index
    %c2 = arith.constant 2 : index
    %c0_39 = arith.constant 0 : index
    %c0_40 = arith.constant 0 : index
    %77 = vector.load %arg9[%c0_38, %c2, %c0_39, %c0_40] : memref<1x4x8x8xf32, #tpu.memory_space<vmem>>, vector<1x1x8x8xf32>
    %78 = vector.shape_cast %77 : vector<1x1x8x8xf32> to vector<8x8xf32>
    %79 = vector.shape_cast %76 : vector<8x8xf32> to vector<1x1x8x8xf32>
    tpu.vector_store %arg9[%c0_38, %c2, %c0_39, %c0_40], %79 {strides = array<i32>} : memref<1x4x8x8xf32, #tpu.memory_space<vmem>>, vector<1x1x8x8xf32>,
    %80 = vector.extract_strided_slice %10 {offsets = [0, 192], sizes = [8, 64], strides = [1, 1]} : vector<8x256xf32> to vector<8x64xf32>
    %81 = vector.extract_strided_slice %11 {offsets = [0, 192], sizes = [8, 64], strides = [1, 1]} : vector<8x256xf32> to vector<8x64xf32>
    %82 = arith.mulf %80, %5 : vector<8x64xf32>
    %c32_i32_41 = arith.constant 32 : i32
    %83 = tpu.dynamic_rotate %80 by %c32_i32_41 dim 1 : vector<8x64xf32>, i32 -> vector<8x64xf32>
    %84 = arith.mulf %83, %4 : vector<8x64xf32>
    %85 = arith.addf %82, %84 : vector<8x64xf32>
    %86 = arith.mulf %81, %5 : vector<8x64xf32>
    %c32_i32_42 = arith.constant 32 : i32
    %87 = tpu.dynamic_rotate %81 by %c32_i32_42 dim 1 : vector<8x64xf32>, i32 -> vector<8x64xf32>
    %88 = arith.mulf %87, %4 : vector<8x64xf32>
    %89 = arith.addf %86, %88 : vector<8x64xf32>
    %90 = arith.truncf %85 : vector<8x64xf32> to vector<8x64xbf16>
    %91 = arith.truncf %89 : vector<8x64xf32> to vector<8x64xbf16>
    %cst_43 = arith.constant dense<0.000000e+00> : vector<8x8xf32>
    %92 = tpu.matmul %90, %91, %cst_43 {dimension_numbers = #tpu.dot_dimension_numbers<[1], [1], [0], [0], [0, 0, 1, 0], [], []>} : vector<8x64xbf16>, vector<8x64xbf16>, vector<8x8xf32> -> vector<8x8xf32>
    %cst_44 = arith.constant -1.250000e+11 : f32
    %93 = vector.broadcast %cst_44 : f32 to vector<8x8xf32>
    %94 = arith.select %22, %92, %93 : vector<8x8xi1>, vector<8x8xf32>
    %95 = arith.addf %94, %6 : vector<8x8xf32>
    %c0_45 = arith.constant 0 : index
    %c3 = arith.constant 3 : index
    %c0_46 = arith.constant 0 : index
    %c0_47 = arith.constant 0 : index
    %96 = vector.load %arg9[%c0_45, %c3, %c0_46, %c0_47] : memref<1x4x8x8xf32, #tpu.memory_space<vmem>>, vector<1x1x8x8xf32>
    %97 = vector.shape_cast %96 : vector<1x1x8x8xf32> to vector<8x8xf32>
    %98 = vector.shape_cast %95 : vector<8x8xf32> to vector<1x1x8x8xf32>
    tpu.vector_store %arg9[%c0_45, %c3, %c0_46, %c0_47], %98 {strides = array<i32>} : memref<1x4x8x8xf32, #tpu.memory_space<vmem>>, vector<1x1x8x8xf32>,
    return
  }
  func.func @transform_0(%arg0: i32) -> (i32, i32, i32) {
    %c0_i32 = arith.constant 0 : i32
    %c0_i32_0 = arith.constant 0 : i32
    %c0_i32_1 = arith.constant 0 : i32
    return %arg0, %c0_i32, %c0_i32_0 : i32, i32, i32
  }
  func.func @transform_1(%arg0: i32) -> (i32, i32) {
    %c0_i32 = arith.constant 0 : i32
    %c0_i32_0 = arith.constant 0 : i32
    %c0_i32_1 = arith.constant 0 : i32
    return %c0_i32, %c0_i32_0 : i32, i32
  }
  func.func @transform_2(%arg0: i32) -> (i32, i32) {
    %c0_i32 = arith.constant 0 : i32
    %c0_i32_0 = arith.constant 0 : i32
    %c0_i32_1 = arith.constant 0 : i32
    return %c0_i32, %c0_i32_0 : i32, i32
  }
  func.func @transform_3(%arg0: i32) -> (i32, i32) {
    %c0_i32 = arith.constant 0 : i32
    %c0_i32_0 = arith.constant 0 : i32
    %c0_i32_1 = arith.constant 0 : i32
    return %c0_i32, %c0_i32_0 : i32, i32
  }
  func.func @transform_4(%arg0: i32) -> (i32, i32) {
    %c0_i32 = arith.constant 0 : i32
    %c0_i32_0 = arith.constant 0 : i32
    %c0_i32_1 = arith.constant 0 : i32
    return %c0_i32, %c0_i32_0 : i32, i32
  }
  func.func @transform_5(%arg0: i32) -> (i32, i32) {
    %c0_i32 = arith.constant 0 : i32
    %c0_i32_0 = arith.constant 0 : i32
    %c0_i32_1 = arith.constant 0 : i32
    return %c0_i32, %c0_i32_0 : i32, i32
  }
  func.func @transform_6(%arg0: i32) -> (i32, i32, i32) {
    %c0_i32 = arith.constant 0 : i32
    %c0_i32_0 = arith.constant 0 : i32
    %c0_i32_1 = arith.constant 0 : i32
    return %arg0, %c0_i32, %c0_i32_0 : i32, i32, i32
  }
  func.func @transform_7(%arg0: i32) -> (i32, i32, i32) {
    %c0_i32 = arith.constant 0 : i32
    %c0_i32_0 = arith.constant 0 : i32
    %c0_i32_1 = arith.constant 0 : i32
    return %arg0, %c0_i32, %c0_i32_0 : i32, i32, i32
  }
  func.func @transform_8(%arg0: i32) -> (i32, i32, i32, i32) {
    %c0_i32 = arith.constant 0 : i32
    %c0_i32_0 = arith.constant 0 : i32
    %c0_i32_1 = arith.constant 0 : i32
    %c0_i32_2 = arith.constant 0 : i32
    return %arg0, %c0_i32, %c0_i32_0, %c0_i32_1 : i32, i32, i32, i32
  }
}

</mosaic_0001>

<llo_original>
// kernel: tpu_custom_call.1
$region0: #{tpu_custom_call.1}
  #allocation0 [shape = 'u32[]', space=smem, size = 0x4, offset = 0x4, fixed_abs, tag = 'smem constant byte address 0x4 - core index']
  #allocation1 [shape = 'u32[144,128]{1,0:T(1,128)}', space=vmem, size = 0x12000, scoped, tag = 'internal scratch']
  %s0 = inlined_call_operand.vmem [shape: bf16[2,8,32], index: 0, kind: input, shape index: {}]
  %s1 = inlined_call_operand.hbm [shape: bf16[32,512], index: 1, kind: input, shape index: {}]
  %s2 = inlined_call_operand.hbm [shape: f32[1,512], index: 2, kind: input, shape index: {}]
  %s3 = inlined_call_operand.vmem [shape: f32[8,64], index: 3, kind: input, shape index: {}]
  %s4 = inlined_call_operand.vmem [shape: f32[8,64], index: 4, kind: input, shape index: {}]
  %s5 = inlined_call_operand.vmem [shape: f32[8,8], index: 5, kind: input, shape index: {}]
  %s6 = inlined_call_operand.vmem [shape: f32[2,8,1], index: 6, kind: input, shape index: {}]
  %s7 = inlined_call_operand.vmem [shape: f32[2,1,8], index: 7, kind: input, shape index: {}]
  %s8 = inlined_call_operand.hbm [shape: f32[2,4,8,8], index: 8, kind: output, shape index: {}]
  %s9 = sld [smem:[#allocation0]]
  $region73: #{tpu_custom_call.1} parent=0
    _
  %s11 = ssub.s32 1, %s9
  %s12 = scalar_select 0, %s11, %s9
  $region1: #{tpu_custom_call.1} parent=0
    #allocation2 [shape = 'u8[32768]{0}', space=vmem, size = 0x8000, scoped, tag = 'input window, operand 1, single buffered']
    #allocation3 [shape = 's32[2]{0}', space=sflag, size = 0x8, scoped, tag = 'scoped memory for tpu_custom_call.1']
    #allocation4 [shape = 's32[2]{0}', space=sflag, size = 0x8, scoped, tag = 'scoped memory for tpu_custom_call.1']
    #allocation5 [shape = 'u8[2048]{0}', space=vmem, size = 0x800, scoped, tag = 'input window, operand 2, single buffered']
    #allocation6 [shape = 's32[1]{0}', space=sflag, size = 0x4, scoped, tag = 'scoped memory for tpu_custom_call.1']
    #allocation7 [shape = 'u8[32768]{0}', space=vmem, size = 0x8000, scoped, tag = 'output window, operand 0']
    %13 = vsyncpa [#allocation3], 0
    %14 = vsyncpa [#allocation6], 0
    %15 = vsyncpa [#allocation4], 0
    %s16 = scalar_lea.sflag [#allocation4], 1
    %17 = vsyncpa %s16, 0
    loop: start=0, step=1, limit=4
    $region2: #{tpu_custom_call.1} parent=1 // loop_pre_header
      _
    $region3: #{tpu_custom_call.1} parent=1 // loop_header
      %s19 = sphi 0, %s23
      %p20 = scmp.ge.s32.totalorder %s19, 4
      %s29 = sphi 0, %s31
      %s32 = sphi 0, %s29
      %s33 = sphi 0, %s32
      %s49 = sphi 0, %s33
      %s53 = sphi 0, %s53
      %s55 = sphi 0, %s53
      %s56 = sphi 0, %s55
      %s70 = sphi 0, %s56
      %s74 = sphi 0, %s74
      %s76 = sphi 0, %s74
      %s77 = sphi 0, %s76
      %s91 = sphi 0, %s77
      %s95 = sphi 0, %s95
      %s97 = sphi 0, %s95
      %s98 = sphi 0, %s97
      %s112 = sphi 0, %s98
      %s116 = sphi 0, %s116
      %s118 = sphi 0, %s116
      %s119 = sphi 0, %s118
      %s133 = sphi 0, %s119
      %s137 = sphi 0, %s137
      %s139 = sphi 0, %s137
      %s140 = sphi 0, %s139
      %s154 = sphi 0, %s140
      %s160 = sphi 0, %s162
      %s163 = sphi 0, %s160
      %s164 = sphi 0, %s163
      %s180 = sphi 0, %s164
      %s186 = sphi 0, %s188
      %s189 = sphi 0, %s186
      %s190 = sphi 0, %s189
      %s206 = sphi 0, %s190
      %s212 = sphi 0, %s214
      %s215 = sphi 0, %s212
      %s216 = sphi 0, %s215
      %s232 = sphi 0, %s216
    $region4: #{tpu_custom_call.1} parent=1 // loop_header_branch
      %22 = sbr.rel (%p20) target = $region8
    $region5: #{tpu_custom_call.1} parent=1 // loop_body
      %s24 = ssub.s32 %s19, 1
      %s25 = ssub.s32 %s19, 2
      %s26 = sadd.s32 %s19, 1
      %s27 = ssub.s32 %s19, %s26
      %p28 = scmp.eq.s32.totalorder %s27, 0
      %s30 = sadd.s32 %s29, 1
      %s31 = scalar_select %p28, %s29, %s30
      %p34 = pneg %p28
      %p35 = scmp.eq.s32.totalorder %s19, 1
      %p36 = por %p34, %p35
      %p37 = scmp.ne.s32.totalorder %s29, %s32
      %p38 = scmp.eq.s32.totalorder %s19, 0
      %p39 = por %p37, %p38
      %p40 = scmp.ne.s32.totalorder %s29, %s32
      %p41 = scmp.eq.s32.totalorder %s24, 1
      %p42 = por %p40, %p41
      %p43 = scmp.ne.s32.totalorder %s32, %s33
      %p44 = scmp.eq.s32.totalorder %s24, 0
      %p45 = por %p43, %p44
      %p46 = scmp.ne.s32.totalorder %s32, %s33
      %p47 = scmp.eq.s32.totalorder %s25, 1
      %p48 = por %p46, %p47
      %p50 = scmp.ne.s32.totalorder %s33, %s49
      %p51 = scmp.eq.s32.totalorder %s25, 0
      %p52 = por %p50, %p51
      %s54 = sadd.s32 %s53, 1
      %p57 = scmp.eq.s32.totalorder %s19, 1
      %p58 = scmp.ne.s32.totalorder %s53, %s55
      %p59 = scmp.eq.s32.totalorder %s19, 0
      %p60 = por %p58, %p59
      %p61 = scmp.ne.s32.totalorder %s53, %s55
      %p62 = scmp.eq.s32.totalorder %s24, 1
      %p63 = por %p61, %p62
      %p64 = scmp.ne.s32.totalorder %s55, %s56
      %p65 = scmp.eq.s32.totalorder %s24, 0
      %p66 = por %p64, %p65
      %p67 = scmp.ne.s32.totalorder %s55, %s56
      %p68 = scmp.eq.s32.totalorder %s25, 1
      %p69 = por %p67, %p68
      %p71 = scmp.ne.s32.totalorder %s56, %s70
      %p72 = scmp.eq.s32.totalorder %s25, 0
      %p73 = por %p71, %p72
      %s75 = sadd.s32 %s74, 1
      %p78 = scmp.eq.s32.totalorder %s19, 1
      %p79 = scmp.ne.s32.totalorder %s74, %s76
      %p80 = scmp.eq.s32.totalorder %s19, 0
      %p81 = por %p79, %p80
      %p82 = scmp.ne.s32.totalorder %s74, %s76
      %p83 = scmp.eq.s32.totalorder %s24, 1
      %p84 = por %p82, %p83
      %p85 = scmp.ne.s32.totalorder %s76, %s77
      %p86 = scmp.eq.s32.totalorder %s24, 0
      %p87 = por %p85, %p86
      %p88 = scmp.ne.s32.totalorder %s76, %s77
      %p89 = scmp.eq.s32.totalorder %s25, 1
      %p90 = por %p88, %p89
      %p92 = scmp.ne.s32.totalorder %s77, %s91
      %p93 = scmp.eq.s32.totalorder %s25, 0
      %p94 = por %p92, %p93
      %s96 = sadd.s32 %s95, 1
      %p99 = scmp.eq.s32.totalorder %s19, 1
      %p100 = scmp.ne.s32.totalorder %s95, %s97
      %p101 = scmp.eq.s32.totalorder %s19, 0
      %p102 = por %p100, %p101
      %p103 = scmp.ne.s32.totalorder %s95, %s97
      %p104 = scmp.eq.s32.totalorder %s24, 1
      %p105 = por %p103, %p104
      %p106 = scmp.ne.s32.totalorder %s97, %s98
      %p107 = scmp.eq.s32.totalorder %s24, 0
      %p108 = por %p106, %p107
      %p109 = scmp.ne.s32.totalorder %s97, %s98
      %p110 = scmp.eq.s32.totalorder %s25, 1
      %p111 = por %p109, %p110
      %p113 = scmp.ne.s32.totalorder %s98, %s112
      %p114 = scmp.eq.s32.totalorder %s25, 0
      %p115 = por %p113, %p114
      %s117 = sadd.s32 %s116, 1
      %p120 = scmp.eq.s32.totalorder %s19, 1
      %p121 = scmp.ne.s32.totalorder %s116, %s118
      %p122 = scmp.eq.s32.totalorder %s19, 0
      %p123 = por %p121, %p122
      %p124 = scmp.ne.s32.totalorder %s116, %s118
      %p125 = scmp.eq.s32.totalorder %s24, 1
      %p126 = por %p124, %p125
      %p127 = scmp.ne.s32.totalorder %s118, %s119
      %p128 = scmp.eq.s32.totalorder %s24, 0
      %p129 = por %p127, %p128
      %p130 = scmp.ne.s32.totalorder %s118, %s119
      %p131 = scmp.eq.s32.totalorder %s25, 1
      %p132 = por %p130, %p131
      %p134 = scmp.ne.s32.totalorder %s119, %s133
      %p135 = scmp.eq.s32.totalorder %s25, 0
      %p136 = por %p134, %p135
      %s138 = sadd.s32 %s137, 1
      %p141 = scmp.eq.s32.totalorder %s19, 1
      %p142 = scmp.ne.s32.totalorder %s137, %s139
      %p143 = scmp.eq.s32.totalorder %s19, 0
      %p144 = por %p142, %p143
      %p145 = scmp.ne.s32.totalorder %s137, %s139
      %p146 = scmp.eq.s32.totalorder %s24, 1
      %p147 = por %p145, %p146
      %p148 = scmp.ne.s32.totalorder %s139, %s140
      %p149 = scmp.eq.s32.totalorder %s24, 0
      %p150 = por %p148, %p149
      %p151 = scmp.ne.s32.totalorder %s139, %s140
      %p152 = scmp.eq.s32.totalorder %s25, 1
      %p153 = por %p151, %p152
      %p155 = scmp.ne.s32.totalorder %s140, %s154
      %p156 = scmp.eq.s32.totalorder %s25, 0
      %p157 = por %p155, %p156
      %s158 = ssub.s32 %s19, %s26
      %p159 = scmp.eq.s32.totalorder %s158, 0
      %s161 = sadd.s32 %s160, 1
      %s162 = scalar_select %p159, %s160, %s161
      %p165 = pneg %p159
      %p166 = scmp.eq.s32.totalorder %s19, 1
      %p167 = por %p165, %p166
      %p168 = scmp.ne.s32.totalorder %s160, %s163
      %p169 = scmp.eq.s32.totalorder %s19, 0
      %p170 = por %p168, %p169
      %p171 = scmp.ne.s32.totalorder %s160, %s163
      %p172 = scmp.eq.s32.totalorder %s24, 1
      %p173 = por %p171, %p172
      %p174 = scmp.ne.s32.totalorder %s163, %s164
      %p175 = scmp.eq.s32.totalorder %s24, 0
      %p176 = por %p174, %p175
      %p177 = scmp.ne.s32.totalorder %s163, %s164
      %p178 = scmp.eq.s32.totalorder %s25, 1
      %p179 = por %p177, %p178
      %p181 = scmp.ne.s32.totalorder %s164, %s180
      %p182 = scmp.eq.s32.totalorder %s25, 0
      %p183 = por %p181, %p182
      %s184 = ssub.s32 %s19, %s26
      %p185 = scmp.eq.s32.totalorder %s184, 0
      %s187 = sadd.s32 %s186, 1
      %s188 = scalar_select %p185, %s186, %s187
      %p191 = pneg %p185
      %p192 = scmp.eq.s32.totalorder %s19, 1
      %p193 = por %p191, %p192
      %p194 = scmp.ne.s32.totalorder %s186, %s189
      %p195 = scmp.eq.s32.totalorder %s19, 0
      %p196 = por %p194, %p195
      %p197 = scmp.ne.s32.totalorder %s186, %s189
      %p198 = scmp.eq.s32.totalorder %s24, 1
      %p199 = por %p197, %p198
      %p200 = scmp.ne.s32.totalorder %s189, %s190
      %p201 = scmp.eq.s32.totalorder %s24, 0
      %p202 = por %p200, %p201
      %p203 = scmp.ne.s32.totalorder %s189, %s190
      %p204 = scmp.eq.s32.totalorder %s25, 1
      %p205 = por %p203, %p204
      %p207 = scmp.ne.s32.totalorder %s190, %s206
      %p208 = scmp.eq.s32.totalorder %s25, 0
      %p209 = por %p207, %p208
      %s210 = ssub.s32 %s19, %s26
      %p211 = scmp.eq.s32.totalorder %s210, 0
      %s213 = sadd.s32 %s212, 1
      %s214 = scalar_select %p211, %s212, %s213
      %p217 = pneg %p211
      %p218 = scmp.eq.s32.totalorder %s19, 1
      %p219 = por %p217, %p218
      %p220 = scmp.ne.s32.totalorder %s212, %s215
      %p221 = scmp.eq.s32.totalorder %s19, 0
      %p222 = por %p220, %p221
      %p223 = scmp.ne.s32.totalorder %s212, %s215
      %p224 = scmp.eq.s32.totalorder %s24, 1
      %p225 = por %p223, %p224
      %p226 = scmp.ne.s32.totalorder %s215, %s216
      %p227 = scmp.eq.s32.totalorder %s24, 0
      %p228 = por %p226, %p227
      %p229 = scmp.ne.s32.totalorder %s215, %s216
      %p230 = scmp.eq.s32.totalorder %s25, 1
      %p231 = por %p229, %p230
      %p233 = scmp.ne.s32.totalorder %s216, %s232
      %p234 = scmp.eq.s32.totalorder %s25, 0
      %p235 = por %p233, %p234
      %p236 = scmp.le.s32.totalorder 1, %s19
      %p237 = scmp.lt.s32.totalorder %s19, 3
      %p238 = pnand %p236, %p237
      %p239 = pneg %p238
      // Predicated region
      $region9: #{tpu_custom_call.1} parent=5 // pred_check
        _
      $region10: #{tpu_custom_call.1} parent=5 // pred_check_branch
        %241 = sbr.rel (%p238) target = $region12
      $region11: #{tpu_custom_call.1} parent=5 // pred_region
        %s242 = ssub.s32 %s19, 1
        // Predicated region
        $region13: #{tpu_custom_call.1} parent=11 // pred_check
          %p243 = pneg %p66
        $region14: #{tpu_custom_call.1} parent=11 // pred_check_branch
          %245 = sbr.rel (%p243) target = $region16
        $region15: #{tpu_custom_call.1} parent=11 // pred_region
          %s247 = ssub.s32 1024, 1024
          %248 = vsyncadd [#allocation3], %s247
          %s249 = sshll.u32 [#allocation2], 4
          %s250 = int_to_ptr.vmem [resolvable:$true] %s249
          %255 = dma.hbm_to_vmem [thread:$0]  %s1, 1024, %s250, [#allocation3], 256, 256, 16
        $region16: #{tpu_custom_call.1} parent=11 // pred_fallthru
          _
        // Predicated region
        $region17: #{tpu_custom_call.1} parent=11 // pred_check
          %p256 = pneg %p87
        $region18: #{tpu_custom_call.1} parent=11 // pred_check_branch
          %258 = sbr.rel (%p256) target = $region20
        $region19: #{tpu_custom_call.1} parent=11 // pred_region
          %s260 = ssub.s32 64, 64
          %261 = vsyncadd [#allocation6], %s260
          %s263 = sshll.u32 [#allocation5], 4
          %s264 = int_to_ptr.vmem [resolvable:$true] %s263
          %266 = dma.hbm_to_vmem [thread:$0]  %s2, 64, %s264, [#allocation6]
        $region20: #{tpu_custom_call.1} parent=11 // pred_fallthru
          _
        // Predicated region
        $region21: #{tpu_custom_call.1} parent=11 // pred_check
          %p267 = pneg %p108
        $region22: #{tpu_custom_call.1} parent=11 // pred_check_branch
          %269 = sbr.rel (%p267) target = $region24
        $region23: #{tpu_custom_call.1} parent=11 // pred_region
          _
        $region24: #{tpu_custom_call.1} parent=11 // pred_fallthru
          _
        // Predicated region
        $region25: #{tpu_custom_call.1} parent=11 // pred_check
          %p270 = pneg %p129
        $region26: #{tpu_custom_call.1} parent=11 // pred_check_branch
          %272 = sbr.rel (%p270) target = $region28
        $region27: #{tpu_custom_call.1} parent=11 // pred_region
          _
        $region28: #{tpu_custom_call.1} parent=11 // pred_fallthru
          _
        // Predicated region
        $region29: #{tpu_custom_call.1} parent=11 // pred_check
          %p273 = pneg %p150
        $region30: #{tpu_custom_call.1} parent=11 // pred_check_branch
          %275 = sbr.rel (%p273) target = $region32
        $region31: #{tpu_custom_call.1} parent=11 // pred_region
          _
        $region32: #{tpu_custom_call.1} parent=11 // pred_fallthru
          _
      $region12: #{tpu_custom_call.1} parent=5 // pred_fallthru
        _
      %p276 = scmp.lt.s32.totalorder %s19, 2
      // Predicated region
      $region33: #{tpu_custom_call.1} parent=5 // pred_check
        %p277 = pneg %p276
      $region34: #{tpu_custom_call.1} parent=5 // pred_check_branch
        %279 = sbr.rel (%p277) target = $region36
      $region35: #{tpu_custom_call.1} parent=5 // pred_region
        // Predicated region
        $region37: #{tpu_custom_call.1} parent=35 // pred_check
          %p280 = pneg %p39
        $region38: #{tpu_custom_call.1} parent=35 // pred_check_branch
          %282 = sbr.rel (%p280) target = $region40
        $region39: #{tpu_custom_call.1} parent=35 // pred_region
          %p283 = scmp.lt.s32.totalorder %s19, 1
          %s284 = scalar_select %p283, %s19, 1
          %s285 = smul.addr %s284, 4
          %s286 = scalar_lea.vmem %s0, %s285
        $region40: #{tpu_custom_call.1} parent=35 // pred_fallthru
          _
        // Predicated region
        $region41: #{tpu_custom_call.1} parent=35 // pred_check
          %p287 = pneg %p170
        $region42: #{tpu_custom_call.1} parent=35 // pred_check_branch
          %289 = sbr.rel (%p287) target = $region44
        $region43: #{tpu_custom_call.1} parent=35 // pred_region
          %p290 = scmp.lt.s32.totalorder %s19, 1
          %s291 = scalar_select %p290, %s19, 1
          %s292 = smul.addr %s291, 8
          %s293 = scalar_lea.vmem %s6, %s292
        $region44: #{tpu_custom_call.1} parent=35 // pred_fallthru
          _
        // Predicated region
        $region45: #{tpu_custom_call.1} parent=35 // pred_check
          %p294 = pneg %p196
        $region46: #{tpu_custom_call.1} parent=35 // pred_check_branch
          %296 = sbr.rel (%p294) target = $region48
        $region47: #{tpu_custom_call.1} parent=35 // pred_region
          %p297 = scmp.lt.s32.totalorder %s19, 1
          %s298 = scalar_select %p297, %s19, 1
          %s299 = scalar_lea.vmem %s7, %s298
        $region48: #{tpu_custom_call.1} parent=35 // pred_fallthru
          _
      $region36: #{tpu_custom_call.1} parent=5 // pred_fallthru
        _
      %p300 = scmp.le.s32.totalorder 1, %s19
      %p301 = scmp.lt.s32.totalorder %s19, 3
      %p302 = pnand %p300, %p301
      %p303 = pneg %p302
      // Predicated region
      $region49: #{tpu_custom_call.1} parent=5 // pred_check
        _
      $region50: #{tpu_custom_call.1} parent=5 // pred_check_branch
        %305 = sbr.rel (%p302) target = $region52
      $region51: #{tpu_custom_call.1} parent=5 // pred_region
        %s306 = ssub.s32 %s19, 1
        // Predicated region
        $region53: #{tpu_custom_call.1} parent=51 // pred_check
          %p307 = pneg %p66
        $region54: #{tpu_custom_call.1} parent=51 // pred_check_branch
          %309 = sbr.rel (%p307) target = $region56
        $region55: #{tpu_custom_call.1} parent=51 // pred_region
          %310 = dma.done [#allocation3], 1024
        $region56: #{tpu_custom_call.1} parent=51 // pred_fallthru
          _
        // Predicated region
        $region57: #{tpu_custom_call.1} parent=51 // pred_check
          %p311 = pneg %p87
        $region58: #{tpu_custom_call.1} parent=51 // pred_check_branch
          %313 = sbr.rel (%p311) target = $region60
        $region59: #{tpu_custom_call.1} parent=51 // pred_region
          %314 = dma.done [#allocation6], 64
        $region60: #{tpu_custom_call.1} parent=51 // pred_fallthru
          _
        %p315 = scmp.lt.s32.totalorder %s24, 1
        %s316 = scalar_select %p315, %s24, 1
        %s317 = smul.addr %s316, 4
        %s318 = scalar_lea.vmem %s0, %s317
        %p319 = pneg %p45
        %p320 = pneg %p42
        %p321 = pneg %p66
        %p322 = pneg %p63
        %p323 = pneg %p87
        %p324 = pneg %p84
        %p325 = pneg %p108
        %p326 = pneg %p105
        %p327 = pneg %p129
        %p328 = pneg %p126
        %p329 = pneg %p150
        %p330 = pneg %p147
        %p331 = scmp.lt.s32.totalorder %s24, 1
        %s332 = scalar_select %p331, %s24, 1
        %s333 = smul.addr %s332, 8
        %s334 = scalar_lea.vmem %s6, %s333
        %p335 = pneg %p176
        %p336 = pneg %p173
        %p337 = scmp.lt.s32.totalorder %s24, 1
        %s338 = scalar_select %p337, %s24, 1
        %s339 = scalar_lea.vmem %s7, %s338
        %p340 = pneg %p202
        %p341 = pneg %p199
        %p342 = pneg %p228
        %p343 = pneg %p225
        %s344 = sand.u32 %s215, 1
        %s345 = scalar_lea.sflag [#allocation4], %s344
        %s346 = sand.u32 %s215, 1
        %s347 = smul.addr %s346, 32
        %s348 = scalar_lea.vmem [#allocation7], %s347
        %p349 = scmp.lt.s32.totalorder %s24, 1
        %s350 = scalar_select %p349, %s24, 1
        %s351 = smul.addr %s350, 4
        %s352 = scalar_lea.vmem %s0, %s351
        %p353 = scmp.lt.s32.totalorder %s24, 1
        %s354 = scalar_select %p353, %s24, 1
        %s355 = smul.addr %s354, 8
        %s356 = scalar_lea.vmem %s6, %s355
        %p357 = scmp.lt.s32.totalorder %s24, 1
        %s358 = scalar_select %p357, %s24, 1
        %s359 = scalar_lea.vmem %s7, %s358
        %v361 = vld [vmem:[%s352] sm:$0xf]
        %v362 = vld [vmem:[#allocation2] sm:$0xff]
        %v363 = vld [vmem:[#allocation2 + $0x8] sm:$0xff]
        %v364 = vld [vmem:[#allocation2 + $0x10] sm:$0xff]
        %v365 = vld [vmem:[#allocation2 + $0x18] sm:$0xff]
        %v366 = vld [vmem:[#allocation2 + $0x20] sm:$0xff]
        %v367 = vld [vmem:[#allocation2 + $0x28] sm:$0xff]
        %v368 = vld [vmem:[#allocation2 + $0x30] sm:$0xff]
        %v369 = vld [vmem:[#allocation2 + $0x38] sm:$0xff]
        %v370 = vld [vmem:[#allocation5] sm:$0xf]
        %v371 = vld [vmem:[%s3] sm:$0xff]
        %v372 = vld [vmem:[%s4] sm:$0xff]
        %v373 = vld [vmem:[%s5] sm:$0xff]
        %v375 = vlaneseq
        %v376 = vshrl.u32 %v375, 7
        %v377 = vsub.s32 0, %v376
        %v378 = vrot.slane %v370, %v377
        %v379 = vlaneseq
        %v380 = vshrl.u32 %v379, 7
        %v381 = vsub.s32 1, %v380
        %v382 = vrot.slane %v370, %v381
        %v383 = vlaneseq
        %v384 = vshrl.u32 %v383, 7
        %v385 = vsub.s32 2, %v384
        %v386 = vrot.slane %v370, %v385
        %v387 = vlaneseq
        %v388 = vshrl.u32 %v387, 7
        %v389 = vsub.s32 3, %v388
        %v390 = vrot.slane %v370, %v389
        %v403 = vunpack.c.l.b16 %v362
        %v404 = vunpack.c.h.b16 %v362
        %v405 = vunpack.c.l.b16 %v363
        %v406 = vunpack.c.h.b16 %v363
        %v407 = vunpack.c.l.b16 %v364
        %v408 = vunpack.c.h.b16 %v364
        %v409 = vunpack.c.l.b16 %v365
        %v410 = vunpack.c.h.b16 %v365
        %v411 = vunpack.c.l.b16 %v366
        %v412 = vunpack.c.h.b16 %v366
        %v413 = vunpack.c.l.b16 %v367
        %v414 = vunpack.c.h.b16 %v367
        %v415 = vunpack.c.l.b16 %v368
        %v416 = vunpack.c.h.b16 %v368
        %v417 = vunpack.c.l.b16 %v369
        %v418 = vunpack.c.h.b16 %v369
        %v419 = vpack.c.b16 %v407, %v403
        %v420 = vpack.c.b16 %v408, %v404
        %v421 = vpack.c.b16 %v409, %v405
        %v422 = vpack.c.b16 %v410, %v406
        %v423 = vpack.c.b16 %v415, %v411
        %v424 = vpack.c.b16 %v416, %v412
        %v425 = vpack.c.b16 %v417, %v413
        %v426 = vpack.c.b16 %v418, %v414
        %vm435 = vcmask 261120
        %v437 = vsel %vm435, %v361, 0
        %439 = vmatprep.subr.bf16.mxu0 %v420
        %440 = vmatpush1.bf16.msra.mxu0 %v419
        %441 = vmatprep.subr.bf16.mxu0 %v424
        %442 = vmatpush1.bf16.msra.mxu0 %v423
        %443 = vmatprep.subr.bf16.mxu0 0
        %444 = vmatpush1.bf16.msra.mxu0 0
        %445 = vmatprep.subr.bf16.mxu0 0
        %446 = vmatpush1.bf16.msra.mxu0 0
        %447 = vmatprep.subr.bf16.mxu0 0
        %448 = vmatpush1.bf16.msra.mxu0 0
        %449 = vmatprep.subr.bf16.mxu0 0
        %450 = vmatpush1.bf16.msra.mxu0 0
        %451 = vmatprep.subr.bf16.mxu0 0
        %452 = vmatpush1.bf16.msra.mxu0 0
        %453 = vmatprep.subr.bf16.mxu0 0
        %454 = vmatpush1.bf16.msra.mxu0 0
        %455 = vmatprep.subr.bf16.mxu0 0
        %456 = vmatpush1.bf16.msra.mxu0 0
        %457 = vmatprep.subr.bf16.mxu0 0
        %458 = vmatpush1.bf16.msra.mxu0 0
        %459 = vmatprep.subr.bf16.mxu0 0
        %460 = vmatpush1.bf16.msra.mxu0 0
        %461 = vmatprep.subr.bf16.mxu0 0
        %462 = vmatpush1.bf16.msra.mxu0 0
        %463 = vmatprep.subr.bf16.mxu0 0
        %464 = vmatpush1.bf16.msra.mxu0 0
        %465 = vmatprep.subr.bf16.mxu0 0
        %466 = vmatpush1.bf16.msra.mxu0 0
        %467 = vmatprep.subr.bf16.mxu0 0
        %468 = vmatpush1.bf16.msra.mxu0 0
        %469 = vmatprep.subr.bf16.mxu0 0
        %470 = vmatpush1.bf16.msra.mxu0 0
        %471 = vmatprep.mubr.bf16.mxu0 0
        %472 = vmatmul.mubr.bf16.gmra.mrb[0].mxu0 %v437
        %v473 = vpop.f32.mrb[0].mxu0
        %v474 = vadd.f32 %v378, %v473
        %v475 = vpop.f32.mrb[0].mxu0
        %v476 = vadd.f32 %v382, %v475
        %v477 = vpop.f32.mrb[0].mxu0
        %v478 = vpop.f32.mrb[0].mxu0
        %479 = vdwg.mxu0
        %480 = vmatprep.subr.bf16.mxu0 %v422
        %481 = vmatpush1.bf16.msra.mxu0 %v421
        %482 = vmatprep.subr.bf16.mxu0 %v426
        %483 = vmatpush1.bf16.msra.mxu0 %v425
        %484 = vmatprep.subr.bf16.mxu0 0
        %485 = vmatpush1.bf16.msra.mxu0 0
        %486 = vmatprep.subr.bf16.mxu0 0
        %487 = vmatpush1.bf16.msra.mxu0 0
        %488 = vmatprep.subr.bf16.mxu0 0
        %489 = vmatpush1.bf16.msra.mxu0 0
        %490 = vmatprep.subr.bf16.mxu0 0
        %491 = vmatpush1.bf16.msra.mxu0 0
        %492 = vmatprep.subr.bf16.mxu0 0
        %493 = vmatpush1.bf16.msra.mxu0 0
        %494 = vmatprep.subr.bf16.mxu0 0
        %495 = vmatpush1.bf16.msra.mxu0 0
        %496 = vmatprep.subr.bf16.mxu0 0
        %497 = vmatpush1.bf16.msra.mxu0 0
        %498 = vmatprep.subr.bf16.mxu0 0
        %499 = vmatpush1.bf16.msra.mxu0 0
        %500 = vmatprep.subr.bf16.mxu0 0
        %501 = vmatpush1.bf16.msra.mxu0 0
        %502 = vmatprep.subr.bf16.mxu0 0
        %503 = vmatpush1.bf16.msra.mxu0 0
        %504 = vmatprep.subr.bf16.mxu0 0
        %505 = vmatpush1.bf16.msra.mxu0 0
        %506 = vmatprep.subr.bf16.mxu0 0
        %507 = vmatpush1.bf16.msra.mxu0 0
        %508 = vmatprep.subr.bf16.mxu0 0
        %509 = vmatpush1.bf16.msra.mxu0 0
        %510 = vmatprep.subr.bf16.mxu0 0
        %511 = vmatpush1.bf16.msra.mxu0 0
        %512 = vmatprep.mubr.bf16.mxu0 0
        %513 = vmatmul.mubr.bf16.gmra.mrb[0].mxu0 %v437
        %v514 = vpop.f32.mrb[0].mxu0
        %v515 = vadd.f32 %v386, %v514
        %v516 = vpop.f32.mrb[0].mxu0
        %v517 = vadd.f32 %v390, %v516
        %v518 = vpop.f32.mrb[0].mxu0
        %v519 = vpop.f32.mrb[0].mxu0
        %520 = vdwg.mxu0
        %v521 = vld [vmem:[%s356] sm:$0xff]
        %vm522 = vcmp.gt.f32.partialorder %v521, 0.5
        %v523 = vld [vmem:[%s359] sm:$0x1]
        %vm524 = vcmp.gt.f32.partialorder %v523, 0.5
        %v525 = vsel %vm522, 1, 0
        %526 = vset.pattern.permute.xlu0 0
        %527 = vperm.xlu0 %526, %v525
        %v528 = vpop.permute.xlu0 %527
        %vm529 = vcmp.eq.s32.totalorder %v528, 1
        %v530 = vsel %vm524, 1, 0
        %v531 = vlaneseq
        %v532 = vshrl.u32 %v531, 7
        %v533 = vsub.s32 0, %v532
        %v534 = vrot.slane %v530, %v533
        %vm535 = vcmp.eq.s32.totalorder %v534, 1
        %vm536 = vmand %vm529, %vm535
        %v537 = vmul.f32 %v474, %v372
        %vm538 = vcmask 1048064
        %539 = vrot.lane.b32.xlu0 %v474, 64
        %v540 = vpop.permute.xlu0 %539
        %v541 = vsel %vm538, %v540, %v474
        %542 = vrot.lane.b32.xlu0 %v541, 64
        %v543 = vpop.permute.xlu0 %542
        %v544 = vsel %vm538, %v543, %v474
        %546 = vrot.lane.b32.xlu0 %v371, 32
        %v547 = vpop.permute.xlu0 %546
        %v549 = vmul.f32 %v544, %v547
        %551 = vrot.lane.b32.xlu0 %v549, 96
        %v552 = vpop.permute.xlu0 %551
        %v554 = vadd.f32 %v537, %v552
        %v555 = vmul.f32 %v515, %v372
        %556 = vrot.lane.b32.xlu0 %v515, 64
        %v557 = vpop.permute.xlu0 %556
        %v558 = vsel %vm538, %v557, %v515
        %559 = vrot.lane.b32.xlu0 %v558, 64
        %v560 = vpop.permute.xlu0 %559
        %v561 = vsel %vm538, %v560, %v515
        %v562 = vmul.f32 %v561, %v547
        %564 = vrot.lane.b32.xlu0 %v562, 96
        %v565 = vpop.permute.xlu0 %564
        %v567 = vadd.f32 %v555, %v565
        %v568 = vpack.c.bf16 %v554, %v554
        %v569 = vpack.c.bf16 %v567, %v567
        %vm570 = vcmask 523264
        %v572 = vsel %vm570, %v568, 0
        %v575 = vsel %vm570, %v569, 0
        %577 = vmatprep.subr.bf16.mxu0 0
        %578 = vmatpush1.bf16.xpose.msra.mxu0 %v575
        %579 = vmatprep.subr.bf16.mxu0 0
        %580 = vmatpush1.bf16.xpose.msra.mxu0 0
        %581 = vmatprep.subr.bf16.mxu0 0
        %582 = vmatpush1.bf16.xpose.msra.mxu0 0
        %583 = vmatprep.subr.bf16.mxu0 0
        %584 = vmatpush1.bf16.xpose.msra.mxu0 0
        %585 = vmatprep.subr.bf16.mxu0 0
        %586 = vmatpush1.bf16.xpose.msra.mxu0 0
        %587 = vmatprep.subr.bf16.mxu0 0
        %588 = vmatpush1.bf16.xpose.msra.mxu0 0
        %589 = vmatprep.subr.bf16.mxu0 0
        %590 = vmatpush1.bf16.xpose.msra.mxu0 0
        %591 = vmatprep.subr.bf16.mxu0 0
        %592 = vmatpush1.bf16.xpose.msra.mxu0 0
        %593 = vmatprep.subr.bf16.mxu0 0
        %594 = vmatpush1.bf16.xpose.msra.mxu0 0
        %595 = vmatprep.subr.bf16.mxu0 0
        %596 = vmatpush1.bf16.xpose.msra.mxu0 0
        %597 = vmatprep.subr.bf16.mxu0 0
        %598 = vmatpush1.bf16.xpose.msra.mxu0 0
        %599 = vmatprep.subr.bf16.mxu0 0
        %600 = vmatpush1.bf16.xpose.msra.mxu0 0
        %601 = vmatprep.subr.bf16.mxu0 0
        %602 = vmatpush1.bf16.xpose.msra.mxu0 0
        %603 = vmatprep.subr.bf16.mxu0 0
        %604 = vmatpush1.bf16.xpose.msra.mxu0 0
        %605 = vmatprep.subr.bf16.mxu0 0
        %606 = vmatpush1.bf16.xpose.msra.mxu0 0
        %607 = vmatprep.subr.bf16.mxu0 0
        %608 = vmatpush1.bf16.xpose.msra.mxu0 0
        %609 = vmatprep.mubr.bf16.mxu0 0
        %610 = vmatmul.mubr.bf16.gmra.mrb[0].mxu0 %v572
        %v611 = vpop.f32.mrb[0].mxu0
        %v612 = vadd.f32 0.0, %v611
        %v613 = vpop.f32.mrb[0].mxu0
        %v614 = vpop.f32.mrb[0].mxu0
        %v615 = vpop.f32.mrb[0].mxu0
        %616 = vdwg.mxu0
        %v617 = vsel %vm536, %v612, -1.25e+11
        %v618 = vadd.f32 %v617, %v373
        %vm619 = vcmask 64512
        %620 = vst.msk [vmem:[%s348] sm:$0xff] %vm619, %v618
        %622 = vrot.lane.b32.xlu0 %v372, 64
        %v623 = vpop.permute.xlu0 %622
        %v625 = vmul.f32 %v474, %v623
        %627 = vrot.lane.b32.xlu0 %v474, 64
        %v628 = vpop.permute.xlu0 %627
        %630 = vrot.lane.b32.xlu0 %v628, 64
        %v631 = vpop.permute.xlu0 %630
        %v632 = vsel %vm538, %v631, %v628
        %633 = vrot.lane.b32.xlu0 %v632, 64
        %v634 = vpop.permute.xlu0 %633
        %v635 = vsel %vm538, %v634, %v628
        %v636 = vmul.f32 %v635, %v547
        %638 = vrot.lane.b32.xlu0 %v636, 32
        %v639 = vpop.permute.xlu0 %638
        %v641 = vadd.f32 %v625, %v639
        %v642 = vmul.f32 %v515, %v623
        %644 = vrot.lane.b32.xlu0 %v515, 64
        %v645 = vpop.permute.xlu0 %644
        %647 = vrot.lane.b32.xlu0 %v645, 64
        %v648 = vpop.permute.xlu0 %647
        %v649 = vsel %vm538, %v648, %v645
        %650 = vrot.lane.b32.xlu0 %v649, 64
        %v651 = vpop.permute.xlu0 %650
        %v652 = vsel %vm538, %v651, %v645
        %v653 = vmul.f32 %v652, %v547
        %655 = vrot.lane.b32.xlu0 %v653, 32
        %v656 = vpop.permute.xlu0 %655
        %v658 = vadd.f32 %v642, %v656
        %v659 = vpack.c.bf16 %v641, %v641
        %v660 = vpack.c.bf16 %v658, %v658
        %662 = vrot.lane.b32.xlu0 %v659, 64
        %v663 = vpop.permute.xlu0 %662
        %665 = vrot.lane.b32.xlu0 %v660, 64
        %v666 = vpop.permute.xlu0 %665
        %v668 = vsel %vm570, %v663, 0
        %v671 = vsel %vm570, %v666, 0
        %673 = vmatprep.subr.bf16.mxu0 0
        %674 = vmatpush1.bf16.xpose.msra.mxu0 %v671
        %675 = vmatprep.subr.bf16.mxu0 0
        %676 = vmatpush1.bf16.xpose.msra.mxu0 0
        %677 = vmatprep.subr.bf16.mxu0 0
        %678 = vmatpush1.bf16.xpose.msra.mxu0 0
        %679 = vmatprep.subr.bf16.mxu0 0
        %680 = vmatpush1.bf16.xpose.msra.mxu0 0
        %681 = vmatprep.subr.bf16.mxu0 0
        %682 = vmatpush1.bf16.xpose.msra.mxu0 0
        %683 = vmatprep.subr.bf16.mxu0 0
        %684 = vmatpush1.bf16.xpose.msra.mxu0 0
        %685 = vmatprep.subr.bf16.mxu0 0
        %686 = vmatpush1.bf16.xpose.msra.mxu0 0
        %687 = vmatprep.subr.bf16.mxu0 0
        %688 = vmatpush1.bf16.xpose.msra.mxu0 0
        %689 = vmatprep.subr.bf16.mxu0 0
        %690 = vmatpush1.bf16.xpose.msra.mxu0 0
        %691 = vmatprep.subr.bf16.mxu0 0
        %692 = vmatpush1.bf16.xpose.msra.mxu0 0
        %693 = vmatprep.subr.bf16.mxu0 0
        %694 = vmatpush1.bf16.xpose.msra.mxu0 0
        %695 = vmatprep.subr.bf16.mxu0 0
        %696 = vmatpush1.bf16.xpose.msra.mxu0 0
        %697 = vmatprep.subr.bf16.mxu0 0
        %698 = vmatpush1.bf16.xpose.msra.mxu0 0
        %699 = vmatprep.subr.bf16.mxu0 0
        %700 = vmatpush1.bf16.xpose.msra.mxu0 0
        %701 = vmatprep.subr.bf16.mxu0 0
        %702 = vmatpush1.bf16.xpose.msra.mxu0 0
        %703 = vmatprep.subr.bf16.mxu0 0
        %704 = vmatpush1.bf16.xpose.msra.mxu0 0
        %705 = vmatprep.mubr.bf16.mxu0 0
        %706 = vmatmul.mubr.bf16.gmra.mrb[0].mxu0 %v668
        %v707 = vpop.f32.mrb[0].mxu0
        %v708 = vadd.f32 0.0, %v707
        %v709 = vpop.f32.mrb[0].mxu0
        %v710 = vpop.f32.mrb[0].mxu0
        %v711 = vpop.f32.mrb[0].mxu0
        %712 = vdwg.mxu0
        %v713 = vsel %vm536, %v708, -1.25e+11
        %v714 = vadd.f32 %v713, %v373
        %s715 = scalar_lea.vmem %s348, 8 [#allocation7]
        %716 = vst.msk [vmem:[%s715] sm:$0xff] %vm619, %v714
        %v717 = vmul.f32 %v476, %v372
        %718 = vrot.lane.b32.xlu0 %v476, 64
        %v719 = vpop.permute.xlu0 %718
        %v720 = vsel %vm538, %v719, %v476
        %721 = vrot.lane.b32.xlu0 %v720, 64
        %v722 = vpop.permute.xlu0 %721
        %v723 = vsel %vm538, %v722, %v476
        %v724 = vmul.f32 %v723, %v547
        %726 = vrot.lane.b32.xlu0 %v724, 96
        %v727 = vpop.permute.xlu0 %726
        %v729 = vadd.f32 %v717, %v727
        %v730 = vmul.f32 %v517, %v372
        %731 = vrot.lane.b32.xlu0 %v517, 64
        %v732 = vpop.permute.xlu0 %731
        %v733 = vsel %vm538, %v732, %v517
        %734 = vrot.lane.b32.xlu0 %v733, 64
        %v735 = vpop.permute.xlu0 %734
        %v736 = vsel %vm538, %v735, %v517
        %v737 = vmul.f32 %v736, %v547
        %739 = vrot.lane.b32.xlu0 %v737, 96
        %v740 = vpop.permute.xlu0 %739
        %v742 = vadd.f32 %v730, %v740
        %v743 = vpack.c.bf16 %v729, %v729
        %v744 = vpack.c.bf16 %v742, %v742
        %v746 = vsel %vm570, %v743, 0
        %v749 = vsel %vm570, %v744, 0
        %751 = vmatprep.subr.bf16.mxu0 0
        %752 = vmatpush1.bf16.xpose.msra.mxu0 %v749
        %753 = vmatprep.subr.bf16.mxu0 0
        %754 = vmatpush1.bf16.xpose.msra.mxu0 0
        %755 = vmatprep.subr.bf16.mxu0 0
        %756 = vmatpush1.bf16.xpose.msra.mxu0 0
        %757 = vmatprep.subr.bf16.mxu0 0
        %758 = vmatpush1.bf16.xpose.msra.mxu0 0
        %759 = vmatprep.subr.bf16.mxu0 0
        %760 = vmatpush1.bf16.xpose.msra.mxu0 0
        %761 = vmatprep.subr.bf16.mxu0 0
        %762 = vmatpush1.bf16.xpose.msra.mxu0 0
        %763 = vmatprep.subr.bf16.mxu0 0
        %764 = vmatpush1.bf16.xpose.msra.mxu0 0
        %765 = vmatprep.subr.bf16.mxu0 0
        %766 = vmatpush1.bf16.xpose.msra.mxu0 0
        %767 = vmatprep.subr.bf16.mxu0 0
        %768 = vmatpush1.bf16.xpose.msra.mxu0 0
        %769 = vmatprep.subr.bf16.mxu0 0
        %770 = vmatpush1.bf16.xpose.msra.mxu0 0
        %771 = vmatprep.subr.bf16.mxu0 0
        %772 = vmatpush1.bf16.xpose.msra.mxu0 0
        %773 = vmatprep.subr.bf16.mxu0 0
        %774 = vmatpush1.bf16.xpose.msra.mxu0 0
        %775 = vmatprep.subr.bf16.mxu0 0
        %776 = vmatpush1.bf16.xpose.msra.mxu0 0
        %777 = vmatprep.subr.bf16.mxu0 0
        %778 = vmatpush1.bf16.xpose.msra.mxu0 0
        %779 = vmatprep.subr.bf16.mxu0 0
        %780 = vmatpush1.bf16.xpose.msra.mxu0 0
        %781 = vmatprep.subr.bf16.mxu0 0
        %782 = vmatpush1.bf16.xpose.msra.mxu0 0
        %783 = vmatprep.mubr.bf16.mxu0 0
        %784 = vmatmul.mubr.bf16.gmra.mrb[0].mxu0 %v746
        %v785 = vpop.f32.mrb[0].mxu0
        %v786 = vadd.f32 0.0, %v785
        %v787 = vpop.f32.mrb[0].mxu0
        %v788 = vpop.f32.mrb[0].mxu0
        %v789 = vpop.f32.mrb[0].mxu0
        %790 = vdwg.mxu0
        %v791 = vsel %vm536, %v786, -1.25e+11
        %v792 = vadd.f32 %v791, %v373
        %s793 = scalar_lea.vmem %s348, 16 [#allocation7]
        %794 = vst.msk [vmem:[%s793] sm:$0xff] %vm619, %v792
        %v795 = vmul.f32 %v476, %v623
        %797 = vrot.lane.b32.xlu0 %v476, 64
        %v798 = vpop.permute.xlu0 %797
        %800 = vrot.lane.b32.xlu0 %v798, 64
        %v801 = vpop.permute.xlu0 %800
        %v802 = vsel %vm538, %v801, %v798
        %803 = vrot.lane.b32.xlu0 %v802, 64
        %v804 = vpop.permute.xlu0 %803
        %v805 = vsel %vm538, %v804, %v798
        %v806 = vmul.f32 %v805, %v547
        %808 = vrot.lane.b32.xlu0 %v806, 32
        %v809 = vpop.permute.xlu0 %808
        %v811 = vadd.f32 %v795, %v809
        %v812 = vmul.f32 %v517, %v623
        %814 = vrot.lane.b32.xlu0 %v517, 64
        %v815 = vpop.permute.xlu0 %814
        %817 = vrot.lane.b32.xlu0 %v815, 64
        %v818 = vpop.permute.xlu0 %817
        %v819 = vsel %vm538, %v818, %v815
        %820 = vrot.lane.b32.xlu0 %v819, 64
        %v821 = vpop.permute.xlu0 %820
        %v822 = vsel %vm538, %v821, %v815
        %v823 = vmul.f32 %v822, %v547
        %825 = vrot.lane.b32.xlu0 %v823, 32
        %v826 = vpop.permute.xlu0 %825
        %v828 = vadd.f32 %v812, %v826
        %v829 = vpack.c.bf16 %v811, %v811
        %v830 = vpack.c.bf16 %v828, %v828
        %832 = vrot.lane.b32.xlu0 %v829, 64
        %v833 = vpop.permute.xlu0 %832
        %835 = vrot.lane.b32.xlu0 %v830, 64
        %v836 = vpop.permute.xlu0 %835
        %v838 = vsel %vm570, %v833, 0
        %v841 = vsel %vm570, %v836, 0
        %843 = vmatprep.subr.bf16.mxu0 0
        %844 = vmatpush1.bf16.xpose.msra.mxu0 %v841
        %845 = vmatprep.subr.bf16.mxu0 0
        %846 = vmatpush1.bf16.xpose.msra.mxu0 0
        %847 = vmatprep.subr.bf16.mxu0 0
        %848 = vmatpush1.bf16.xpose.msra.mxu0 0
        %849 = vmatprep.subr.bf16.mxu0 0
        %850 = vmatpush1.bf16.xpose.msra.mxu0 0
        %851 = vmatprep.subr.bf16.mxu0 0
        %852 = vmatpush1.bf16.xpose.msra.mxu0 0
        %853 = vmatprep.subr.bf16.mxu0 0
        %854 = vmatpush1.bf16.xpose.msra.mxu0 0
        %855 = vmatprep.subr.bf16.mxu0 0
        %856 = vmatpush1.bf16.xpose.msra.mxu0 0
        %857 = vmatprep.subr.bf16.mxu0 0
        %858 = vmatpush1.bf16.xpose.msra.mxu0 0
        %859 = vmatprep.subr.bf16.mxu0 0
        %860 = vmatpush1.bf16.xpose.msra.mxu0 0
        %861 = vmatprep.subr.bf16.mxu0 0
        %862 = vmatpush1.bf16.xpose.msra.mxu0 0
        %863 = vmatprep.subr.bf16.mxu0 0
        %864 = vmatpush1.bf16.xpose.msra.mxu0 0
        %865 = vmatprep.subr.bf16.mxu0 0
        %866 = vmatpush1.bf16.xpose.msra.mxu0 0
        %867 = vmatprep.subr.bf16.mxu0 0
        %868 = vmatpush1.bf16.xpose.msra.mxu0 0
        %869 = vmatprep.subr.bf16.mxu0 0
        %870 = vmatpush1.bf16.xpose.msra.mxu0 0
        %871 = vmatprep.subr.bf16.mxu0 0
        %872 = vmatpush1.bf16.xpose.msra.mxu0 0
        %873 = vmatprep.subr.bf16.mxu0 0
        %874 = vmatpush1.bf16.xpose.msra.mxu0 0
        %875 = vmatprep.mubr.bf16.mxu0 0
        %876 = vmatmul.mubr.bf16.gmra.mrb[0].mxu0 %v838
        %v877 = vpop.f32.mrb[0].mxu0
        %v878 = vadd.f32 0.0, %v877
        %v879 = vpop.f32.mrb[0].mxu0
        %v880 = vpop.f32.mrb[0].mxu0
        %v881 = vpop.f32.mrb[0].mxu0
        %882 = vdwg.mxu0
        %v883 = vsel %vm536, %v878, -1.25e+11
        %v884 = vadd.f32 %v883, %v373
        %s885 = scalar_lea.vmem %s348, 24 [#allocation7]
        %886 = vst.msk [vmem:[%s885] sm:$0xff] %vm619, %v884
        %s887 = sand.u32 %s215, 1
        %s888 = scalar_lea.sflag [#allocation4], %s887
        %s889 = sand.u32 %s215, 1
        %s890 = smul.addr %s889, 32
        %s891 = scalar_lea.vmem [#allocation7], %s890
        // Predicated region
        $region61: #{tpu_custom_call.1} parent=51 // pred_check
          %p892 = pneg %p225
        $region62: #{tpu_custom_call.1} parent=51 // pred_check_branch
          %894 = sbr.rel (%p892) target = $region64
        $region63: #{tpu_custom_call.1} parent=51 // pred_region
          %s896 = ssub.s32 512, 512
          %897 = vsyncadd %s888, %s896
          %s898 = smul.addr %s24, 4
          %s899 = smul.addr %s898, 128
          %s900 = scalar_lea.hbm %s8, %s899
          %s901 = sshll.u32 %s891, 4
          %s902 = int_to_ptr.vmem [resolvable:$true] %s901
          %907 = dma.vmem_to_hbm [thread:$0]  %s902, 512, %s900, %s888, 128, 128, 8
        $region64: #{tpu_custom_call.1} parent=51 // pred_fallthru
          _
      $region52: #{tpu_custom_call.1} parent=5 // pred_fallthru
        _
      %p908 = scmp.le.s32.totalorder 2, %s19
      // Predicated region
      $region65: #{tpu_custom_call.1} parent=5 // pred_check
        %p909 = pneg %p908
      $region66: #{tpu_custom_call.1} parent=5 // pred_check_branch
        %911 = sbr.rel (%p909) target = $region68
      $region67: #{tpu_custom_call.1} parent=5 // pred_region
        %s912 = ssub.s32 %s19, 2
        // Predicated region
        $region69: #{tpu_custom_call.1} parent=67 // pred_check
          %p913 = pneg %p231
        $region70: #{tpu_custom_call.1} parent=67 // pred_check_branch
          %915 = sbr.rel (%p913) target = $region72
        $region71: #{tpu_custom_call.1} parent=67 // pred_region
          %s916 = sand.u32 %s216, 1
          %s917 = scalar_lea.sflag [#allocation4], %s916
          %s918 = sand.u32 %s216, 1
          %s919 = smul.addr %s918, 32
          %s920 = scalar_lea.vmem [#allocation7], %s919
          %921 = dma.done %s917, 512
        $region72: #{tpu_custom_call.1} parent=67 // pred_fallthru
          _
      $region68: #{tpu_custom_call.1} parent=5 // pred_fallthru
        _
    $region6: #{tpu_custom_call.1} parent=1 // loop_footer
      %s23 = sadd.s32 1, %s19
    $region7: #{tpu_custom_call.1} parent=1 // loop_footer_branch
      %18 = sbr.rel target = $region3
    $region8: #{tpu_custom_call.1} parent=1 // loop_exit
      _
    %922 = vsyncpa [#allocation3], 1
    %s923 = scalar_lea.sflag [#allocation3], 1
    %924 = vsyncpa %s923, 1
    %925 = vsyncpa [#allocation6], 1
    %926 = vsyncpa [#allocation4], 1
    %s927 = scalar_lea.sflag [#allocation4], 1
    %928 = vsyncpa %s927, 1

</llo_original>
